<compile_context>
chip_gen: v7x
topology: tpu7x:2x2x1
jax: 0.10.0
libtpu: 0.0.40
codegen_flags: <defaults>
</compile_context>

<pallas_src>
import functools
import numpy as np
import jax
import jax.numpy as jnp
from jax.experimental import pallas as pl
from jax.experimental.pallas import tpu as pltpu

# MXU input dtype. Kept float32 here because with init_w=1e-3 the FC activations
# are tiny and the correctness check uses rtol=1e-3.  On v6e/v7x flip this to
# jnp.bfloat16 (accumulation stays f32 via preferred_element_type) for ~2x MXU
# rate and half the VMEM/HBM bytes when the tolerance budget allows.
_MXU_DTYPE = jnp.float32

_VMEM = pltpu.MemorySpace.VMEM


# ----------------------------------------------------------------------------
# Pallas kernel 1: the whole FC stack fused (chained matmul + bias + ReLU)
# ----------------------------------------------------------------------------
def _fc_stack_kernel(*refs, n_layers):
    """refs = (x, w0, b0, w1, b1, ..., out).  ReLU after every layer (incl. last_fc)."""
    x_ref, o_ref = refs[0], refs[-1]
    h = x_ref[...]
    for i in range(n_layers):
        w = refs[1 + 2 * i][...]
        b = refs[2 + 2 * i][...]
        h = jnp.dot(h.astype(_MXU_DTYPE), w.astype(_MXU_DTYPE),
                    preferred_element_type=jnp.float32) + b
        h = jnp.maximum(h, 0.0)                     # hidden_activation = ReLU
    o_ref[...] = h.astype(o_ref.dtype)


def fc_stack(x, layers):
    """One fused pallas_call for the whole FC stack.  layers: [(w (K,N), b (1,N))]."""
    B = x.shape[0]
    n_out = layers[-1][0].shape[1]
    operands = [x]
    for w, b in layers:
        operands += [w, b]
    return pl.pallas_call(
        functools.partial(_fc_stack_kernel, n_layers=len(layers)),
        out_shape=jax.ShapeDtypeStruct((B, n_out), jnp.float32),
        in_specs=[pl.BlockSpec(memory_space=_VMEM)] * len(operands),
        out_specs=pl.BlockSpec(memory_space=_VMEM),
    )(*operands)


# ----------------------------------------------------------------------------
# Pallas kernel 2: lane-dense deconv GEMM  (OC, K) @ (K, B*OH*OW) + bias (+ReLU)
# ----------------------------------------------------------------------------
def _deconv_gemm_kernel(w_ref, pat_ref, b_ref, o_ref, *, apply_relu):
    acc = jnp.dot(w_ref[...].astype(_MXU_DTYPE), pat_ref[...].astype(_MXU_DTYPE),
                  preferred_element_type=jnp.float32)
    acc = acc + b_ref[...]                          # bias (OC, 1), lane-broadcast
    if apply_relu:
        acc = jnp.maximum(acc, 0.0)
    o_ref[...] = acc.astype(o_ref.dtype)


def deconv_gemm(w_mat, pat, b_col, *, apply_relu):
    """(OC, K) @ (K, M) + b (+ReLU) -> (OC, M).  M = B*OH*OW is the lane axis."""
    OC, _ = w_mat.shape
    M = pat.shape[1]
    # Shapes here are tiny (M<=242, K<=72): whole-array VMEM blocks, no grid.
    # If the network is scaled up, tile M with a grid:
    #   BlockSpec((OC, TILE_M), lambda i: (0, i)), dimension_semantics=("parallel",),
    # with TILE_M a multiple of 128 sized to v7x's 64 MiB VMEM (2 TCs/chip).
    return pl.pallas_call(
        functools.partial(_deconv_gemm_kernel, apply_relu=apply_relu),
        out_shape=jax.ShapeDtypeStruct((OC, M), jnp.float32),
        in_specs=[pl.BlockSpec(memory_space=_VMEM)] * 3,
        out_specs=pl.BlockSpec(memory_space=_VMEM),
    )(w_mat, pat, b_col)


# ----------------------------------------------------------------------------
# ConvTranspose2d on channel-major activations (PyTorch semantics)
# ----------------------------------------------------------------------------
def conv_transpose2d_cb(x_cb, w_mat, b_col, kH, kW, stride, padding, *, apply_relu):
    """x_cb: (IC, B, H, W); w_mat: (OC, IC*kH*kW) spatially flipped, cols (ic,ky,kx);
    b_col: (OC, 1).  Returns (OC, B, OH, OW) channel-major (feeds the next layer)."""
    IC, B, H, W = x_cb.shape
    s, p = stride, padding
    OH = (H - 1) * s - 2 * p + kH
    OW = (W - 1) * s - 2 * p + kW
    # stride-s conv transpose == stride-1 conv of zero-inserted, (k-1-p)-padded
    # input with the spatially flipped kernel (flip already folded into w_mat).
    up = jnp.zeros((IC, B, (H - 1) * s + 1, (W - 1) * s + 1), x_cb.dtype)
    up = up.at[:, :, ::s, ::s].set(x_cb)
    ph, pw = kH - 1 - p, kW - 1 - p
    xp = jnp.pad(up, ((0, 0), (0, 0), (ph, ph), (pw, pw)))
    # im2col directly in K-major form: rows (ic, ky, kx), cols (b, oh, ow).
    cols = [xp[:, :, i:i + OH, j:j + OW] for i in range(kH) for j in range(kW)]
    pat = jnp.stack(cols, axis=1).reshape(IC * kH * kW, B * OH * OW)
    y = deconv_gemm(w_mat, pat, b_col, apply_relu=apply_relu)      # (OC, B*OH*OW)
    return y.reshape(-1, B, OH, OW)


# ----------------------------------------------------------------------------
# Parameter construction (PyTorch layout, mirrors TwoHeadDCNN.__init__ shapes)
# ----------------------------------------------------------------------------
def make_params(key, *, fc_input_size, hidden_sizes, deconv_input_width,
                deconv_input_height, deconv_input_channels,
                deconv_output_kernel_size, deconv_output_strides,
                deconv_output_channels, kernel_sizes, n_channels, strides,
                paddings, init_w=1e-3):
    assert len(kernel_sizes) == len(n_channels) == len(strides) == len(paddings)
    params = {
        "deconv_input_width": deconv_input_width,
        "deconv_input_height": deconv_input_height,
        "deconv_input_channels": deconv_input_channels,
    }
    deconv_input_size = deconv_input_channels * deconv_input_height * deconv_input_width

    def uniform(key, shape, bound):
        return jax.random.uniform(key, shape, jnp.float32, -bound, bound)

    fc = []
    in_size = fc_input_size
    for h in hidden_sizes:
        key, k1, k2 = jax.random.split(key, 3)
        fc.append((uniform(k1, (h, in_size), init_w), uniform(k2, (h,), init_w)))
        in_size = h
    params["fc"] = fc

    key, k1, k2 = jax.random.split(key, 3)
    params["last_fc"] = (uniform(k1, (deconv_input_size, in_size), init_w),
                         uniform(k2, (deconv_input_size,), init_w))

    deconv = []
    ic = deconv_input_channels
    for oc, ks, st, pd in zip(n_channels, kernel_sizes, strides, paddings):
        key, k1 = jax.random.split(key)
        bound = float(np.sqrt(6.0 / ((ic + oc) * ks * ks)))
        deconv.append((uniform(k1, (ic, oc, ks, ks), bound),
                       jnp.zeros((oc,), jnp.float32), st, pd))
        ic = oc
    params["deconv"] = deconv

    ks, st, oc = deconv_output_kernel_size, deconv_output_strides, deconv_output_channels
    bound = float(np.sqrt(6.0 / ((ic + oc) * ks * ks)))
    key, k1, k2 = jax.random.split(key, 3)
    params["head1"] = (uniform(k1, (ic, oc, ks, ks), bound), jnp.zeros((oc,), jnp.float32), st)
    params["head2"] = (uniform(k2, (ic, oc, ks, ks), bound), jnp.zeros((oc,), jnp.float32), st)
    return params


# ----------------------------------------------------------------------------
# One-time parameter preparation (hoisted flips / transposes / reshapes / casts)
# ----------------------------------------------------------------------------
def _to_w_mat(weight):
    """(IC, OC, kH, kW) PyTorch conv-transpose weight -> (OC, IC*kH*kW) GEMM weight,
    spatially flipped, columns ordered (ic, ky, kx) to match the im2col rows."""
    IC, OC, kH, kW = weight.shape
    w_flip = jnp.flip(jnp.asarray(weight, jnp.float32), axis=(2, 3))
    return jnp.transpose(w_flip, (1, 0, 2, 3)).reshape(OC, IC * kH * kW)


def prepare_params(params):
    prep = {
        "deconv_input_channels": params["deconv_input_channels"],
        "deconv_input_width": params["deconv_input_width"],
        "deconv_input_height": params["deconv_input_height"],
    }
    fc = [(jnp.asarray(W, jnp.float32).T, jnp.asarray(b, jnp.float32).reshape(1, -1))
          for W, b in params["fc"]]
    Wl, bl = params["last_fc"]
    fc.append((jnp.asarray(Wl, jnp.float32).T, jnp.asarray(bl, jnp.float32).reshape(1, -1)))
    prep["fc"] = fc

    deconv = []
    for w, b, s, p in params["deconv"]:
        kH, kW = int(w.shape[2]), int(w.shape[3])
        deconv.append((_to_w_mat(w), jnp.asarray(b, jnp.float32).reshape(-1, 1), kH, kW, s, p))
    prep["deconv"] = deconv

    # Fused heads: concatenate the two head weight matrices / biases along OC.
    w1, b1, s1 = params["head1"]
    w2, b2, s2 = params["head2"]
    assert s1 == s2
    OC = int(w1.shape[1])
    k = int(w1.shape[2])
    w_heads = jnp.concatenate([_to_w_mat(w1), _to_w_mat(w2)], axis=0)       # (2*OC, K)
    b_heads = jnp.concatenate([jnp.asarray(b1, jnp.float32).reshape(-1, 1),
                               jnp.asarray(b2, jnp.float32).reshape(-1, 1)], axis=0)
    prep["heads"] = (w_heads, b_heads, k, s1, OC)
    return prep


# ----------------------------------------------------------------------------
# Forward pass (matches TwoHeadDCNN.forward with batch_norm_*=False)
# ----------------------------------------------------------------------------
def two_head_dcnn_forward(prep, x):
    h = fc_stack(x.astype(jnp.float32), prep["fc"])          # (B, C*W*H), 1 pallas_call
    B = h.shape[0]
    C = prep["deconv_input_channels"]
    D2 = prep["deconv_input_width"]
    D3 = prep["deconv_input_height"]
    # rlkit reshapes as (-1, C, width, height) and the deconvs then treat dim-2 as H.
    # Spec-faithful; for non-square deconv inputs this swaps the spatial grid.
    h = h.reshape(B, C, D2, D3)
    h = jnp.transpose(h, (1, 0, 2, 3))                       # -> channel-major (C, B, H, W)
    for w_mat, b_col, kH, kW, s, p in prep["deconv"]:
        h = conv_transpose2d_cb(h, w_mat, b_col, kH, kW, s, p, apply_relu=True)
    w_heads, b_heads, k, s, OC = prep["heads"]
    y = conv_transpose2d_cb(h, w_heads, b_heads, k, k, s, 0, apply_relu=False)
    out1 = jnp.transpose(y[:OC], (1, 0, 2, 3))               # back to NCHW at the boundary
    out2 = jnp.transpose(y[OC:], (1, 0, 2, 3))
    return out1, out2


# ----------------------------------------------------------------------------
# Pure-numpy reference (float64) for correctness check
# ----------------------------------------------------------------------------
def _np_conv_transpose2d(x, w, b, s, p):
    B, C, H, W = x.shape
    IC, OC, kH, kW = w.shape
    full = np.zeros((B, OC, (H - 1) * s + kH, (W - 1) * s + kW), np.float64)
    for bb in range(B):
        for ic in range(IC):
            for hh in range(H):
                for ww in range(W):
                    full[bb, :, hh * s:hh * s + kH, ww * s:ww * s + kW] += (
                        x[bb, ic, hh, ww] * w[ic])
    OH = (H - 1) * s - 2 * p + kH
    OW = (W - 1) * s - 2 * p + kW
    return full[:, :, p:p + OH, p:p + OW] + b.reshape(1, OC, 1, 1)


def _np_forward(params, x):
    f64 = lambda a: np.asarray(a, np.float64)
    h = f64(x)
    for W, b in params["fc"]:
        h = np.maximum(h @ f64(W).T + f64(b), 0.0)
    Wl, bl = params["last_fc"]
    h = np.maximum(h @ f64(Wl).T + f64(bl), 0.0)
    h = h.reshape(-1, params["deconv_input_channels"],
                  params["deconv_input_width"], params["deconv_input_height"])
    for w, b, s, p in params["deconv"]:
        h = np.maximum(_np_conv_transpose2d(h, f64(w), f64(b), s, p), 0.0)
    w1, b1, s1 = params["head1"]
    w2, b2, s2 = params["head2"]
    o1 = _np_conv_transpose2d(h, f64(w1), f64(b1), s1, 0)
    o2 = _np_conv_transpose2d(h, f64(w2), f64(b2), s2, 0)
    return o1, o2


if __name__ == "__main__":
    key = jax.random.PRNGKey(0)
    kp, kx = jax.random.split(key)

    cfg = dict(
        fc_input_size=16,
        hidden_sizes=(32, 32),
        deconv_input_width=3,
        deconv_input_height=3,
        deconv_input_channels=4,
        deconv_output_kernel_size=3,
        deconv_output_strides=2,
        deconv_output_channels=3,
        kernel_sizes=(3,),
        n_channels=(8,),
        strides=(2,),
        paddings=(1,),
        init_w=1e-3,
    )
    params = make_params(kp, **cfg)
    prep = prepare_params(params)

    batch = 2
    x = jax.random.normal(kx, (batch, cfg["fc_input_size"]), jnp.float32)

    fwd = jax.jit(functools.partial(two_head_dcnn_forward, prep))
    out1, out2 = jax.block_until_ready(fwd(x))

    # shapes: (B,4,3,3) -deconv(k3,s2,p1)-> (B,8,5,5) -heads(k3,s2,p0)-> (B,3,11,11)
    assert out1.shape == (batch, 3, 11, 11) and out2.shape == (batch, 3, 11, 11)

    ref1, ref2 = _np_forward(params, np.asarray(x))
    np.testing.assert_allclose(np.asarray(out1), ref1, rtol=1e-3, atol=1e-6)
    np.testing.assert_allclose(np.asarray(out2), ref2, rtol=1e-3, atol=1e-6)

    print("KERNEL_OK")
</pallas_src>

<mosaic_0001>
module attributes {stable_mosaic.version = 11 : i64} {
  func.func @_fc_stack_kernel(%arg0: memref<2x16xf32, #tpu.memory_space<vmem>>, %arg1: memref<16x32xf32, #tpu.memory_space<vmem>>, %arg2: memref<1x32xf32, #tpu.memory_space<vmem>>, %arg3: memref<32x32xf32, #tpu.memory_space<vmem>>, %arg4: memref<1x32xf32, #tpu.memory_space<vmem>>, %arg5: memref<32x36xf32, #tpu.memory_space<vmem>>, %arg6: memref<1x36xf32, #tpu.memory_space<vmem>>, %arg7: memref<2x36xf32, #tpu.memory_space<vmem>>) attributes {dimension_semantics = [], scalar_prefetch = 0 : i64, scratch_operands = 0 : i64, tpu.core_type = #tpu.core_type<tc>} {
    %c0 = arith.constant 0 : index
    %c0_0 = arith.constant 0 : index
    %0 = vector.load %arg0[%c0, %c0_0] : memref<2x16xf32, #tpu.memory_space<vmem>>, vector<2x16xf32>
    %c0_1 = arith.constant 0 : index
    %c0_2 = arith.constant 0 : index
    %1 = vector.load %arg1[%c0_1, %c0_2] : memref<16x32xf32, #tpu.memory_space<vmem>>, vector<16x32xf32>
    %c0_3 = arith.constant 0 : index
    %c0_4 = arith.constant 0 : index
    %2 = vector.load %arg2[%c0_3, %c0_4] : memref<1x32xf32, #tpu.memory_space<vmem>>, vector<1x32xf32>
    %cst = arith.constant dense<0.000000e+00> : vector<2x32xf32>
    %3 = tpu.matmul %0, %1, %cst {dimension_numbers = #tpu.dot_dimension_numbers<[1], [0], [0], [1], [0, 0, 1, 1], [], []>} : vector<2x16xf32>, vector<16x32xf32>, vector<2x32xf32> -> vector<2x32xf32>
    %4 = vector.broadcast %2 : vector<1x32xf32> to vector<2x32xf32>
    %5 = arith.addf %3, %4 : vector<2x32xf32>
    %cst_5 = arith.constant 0.000000e+00 : f32
    %6 = vector.broadcast %cst_5 : f32 to vector<2x32xf32>
    %7 = arith.maximumf %5, %6 : vector<2x32xf32>
    %c0_6 = arith.constant 0 : index
    %c0_7 = arith.constant 0 : index
    %8 = vector.load %arg3[%c0_6, %c0_7] : memref<32x32xf32, #tpu.memory_space<vmem>>, vector<32x32xf32>
    %c0_8 = arith.constant 0 : index
    %c0_9 = arith.constant 0 : index
    %9 = vector.load %arg4[%c0_8, %c0_9] : memref<1x32xf32, #tpu.memory_space<vmem>>, vector<1x32xf32>
    %cst_10 = arith.constant dense<0.000000e+00> : vector<2x32xf32>
    %10 = tpu.matmul %7, %8, %cst_10 {dimension_numbers = #tpu.dot_dimension_numbers<[1], [0], [0], [1], [0, 0, 1, 1], [], []>} : vector<2x32xf32>, vector<32x32xf32>, vector<2x32xf32> -> vector<2x32xf32>
    %11 = vector.broadcast %9 : vector<1x32xf32> to vector<2x32xf32>
    %12 = arith.addf %10, %11 : vector<2x32xf32>
    %cst_11 = arith.constant 0.000000e+00 : f32
    %13 = vector.broadcast %cst_11 : f32 to vector<2x32xf32>
    %14 = arith.maximumf %12, %13 : vector<2x32xf32>
    %c0_12 = arith.constant 0 : index
    %c0_13 = arith.constant 0 : index
    %15 = vector.load %arg5[%c0_12, %c0_13] : memref<32x36xf32, #tpu.memory_space<vmem>>, vector<32x36xf32>
    %c0_14 = arith.constant 0 : index
    %c0_15 = arith.constant 0 : index
    %16 = vector.load %arg6[%c0_14, %c0_15] : memref<1x36xf32, #tpu.memory_space<vmem>>, vector<1x36xf32>
    %cst_16 = arith.constant dense<0.000000e+00> : vector<2x36xf32>
    %17 = tpu.matmul %14, %15, %cst_16 {dimension_numbers = #tpu.dot_dimension_numbers<[1], [0], [0], [1], [0, 0, 1, 1], [], []>} : vector<2x32xf32>, vector<32x36xf32>, vector<2x36xf32> -> vector<2x36xf32>
    %18 = vector.broadcast %16 : vector<1x36xf32> to vector<2x36xf32>
    %19 = arith.addf %17, %18 : vector<2x36xf32>
    %cst_17 = arith.constant 0.000000e+00 : f32
    %20 = vector.broadcast %cst_17 : f32 to vector<2x36xf32>
    %21 = arith.maximumf %19, %20 : vector<2x36xf32>
    %c0_18 = arith.constant 0 : index
    %c0_19 = arith.constant 0 : index
    %22 = vector.load %arg7[%c0_18, %c0_19] : memref<2x36xf32, #tpu.memory_space<vmem>>, vector<2x36xf32>
    tpu.vector_store %arg7[%c0_18, %c0_19], %21 {strides = array<i32>} : memref<2x36xf32, #tpu.memory_space<vmem>>, vector<2x36xf32>,
    return
  }
}

module attributes {stable_mosaic.version = 11 : i64} {
  func.func @_deconv_gemm_kernel(%arg0: memref<8x36xf32, #tpu.memory_space<vmem>>, %arg1: memref<36x50xf32, #tpu.memory_space<vmem>>, %arg2: memref<8x1xf32, #tpu.memory_space<vmem>>, %arg3: memref<8x50xf32, #tpu.memory_space<vmem>>) attributes {dimension_semantics = [], scalar_prefetch = 0 : i64, scratch_operands = 0 : i64, tpu.core_type = #tpu.core_type<tc>} {
    %c0 = arith.constant 0 : index
    %c0_0 = arith.constant 0 : index
    %0 = vector.load %arg0[%c0, %c0_0] : memref<8x36xf32, #tpu.memory_space<vmem>>, vector<8x36xf32>
    %c0_1 = arith.constant 0 : index
    %c0_2 = arith.constant 0 : index
    %1 = vector.load %arg1[%c0_1, %c0_2] : memref<36x50xf32, #tpu.memory_space<vmem>>, vector<36x50xf32>
    %cst = arith.constant dense<0.000000e+00> : vector<8x50xf32>
    %2 = tpu.matmul %0, %1, %cst {dimension_numbers = #tpu.dot_dimension_numbers<[1], [0], [0], [1], [0, 0, 1, 1], [], []>} : vector<8x36xf32>, vector<36x50xf32>, vector<8x50xf32> -> vector<8x50xf32>
    %c0_3 = arith.constant 0 : index
    %c0_4 = arith.constant 0 : index
    %3 = vector.load %arg2[%c0_3, %c0_4] : memref<8x1xf32, #tpu.memory_space<vmem>>, vector<8x1xf32>
    %4 = vector.broadcast %3 : vector<8x1xf32> to vector<8x50xf32>
    %5 = arith.addf %2, %4 : vector<8x50xf32>
    %cst_5 = arith.constant 0.000000e+00 : f32
    %6 = vector.broadcast %cst_5 : f32 to vector<8x50xf32>
    %7 = arith.maximumf %5, %6 : vector<8x50xf32>
    %c0_6 = arith.constant 0 : index
    %c0_7 = arith.constant 0 : index
    %8 = vector.load %arg3[%c0_6, %c0_7] : memref<8x50xf32, #tpu.memory_space<vmem>>, vector<8x50xf32>
    tpu.vector_store %arg3[%c0_6, %c0_7], %7 {strides = array<i32>} : memref<8x50xf32, #tpu.memory_space<vmem>>, vector<8x50xf32>,
    return
  }
}

module attributes {stable_mosaic.version = 11 : i64} {
  func.func @_deconv_gemm_kernel(%arg0: memref<6x72xf32, #tpu.memory_space<vmem>>, %arg1: memref<72x242xf32, #tpu.memory_space<vmem>>, %arg2: memref<6x1xf32, #tpu.memory_space<vmem>>, %arg3: memref<6x242xf32, #tpu.memory_space<vmem>>) attributes {dimension_semantics = [], scalar_prefetch = 0 : i64, scratch_operands = 0 : i64, tpu.core_type = #tpu.core_type<tc>} {
    %c0 = arith.constant 0 : index
    %c0_0 = arith.constant 0 : index
    %0 = vector.load %arg0[%c0, %c0_0] : memref<6x72xf32, #tpu.memory_space<vmem>>, vector<6x72xf32>
    %c0_1 = arith.constant 0 : index
    %c0_2 = arith.constant 0 : index
    %1 = vector.load %arg1[%c0_1, %c0_2] : memref<72x242xf32, #tpu.memory_space<vmem>>, vector<72x242xf32>
    %cst = arith.constant dense<0.000000e+00> : vector<6x242xf32>
    %2 = tpu.matmul %0, %1, %cst {dimension_numbers = #tpu.dot_dimension_numbers<[1], [0], [0], [1], [0, 0, 1, 1], [], []>} : vector<6x72xf32>, vector<72x242xf32>, vector<6x242xf32> -> vector<6x242xf32>
    %c0_3 = arith.constant 0 : index
    %c0_4 = arith.constant 0 : index
    %3 = vector.load %arg2[%c0_3, %c0_4] : memref<6x1xf32, #tpu.memory_space<vmem>>, vector<6x1xf32>
    %4 = vector.broadcast %3 : vector<6x1xf32> to vector<6x242xf32>
    %5 = arith.addf %2, %4 : vector<6x242xf32>
    %c0_5 = arith.constant 0 : index
    %c0_6 = arith.constant 0 : index
    %6 = vector.load %arg3[%c0_5, %c0_6] : memref<6x242xf32, #tpu.memory_space<vmem>>, vector<6x242xf32>
    tpu.vector_store %arg3[%c0_5, %c0_6], %5 {strides = array<i32>} : memref<6x242xf32, #tpu.memory_space<vmem>>, vector<6x242xf32>,
    return
  }
}

</mosaic_0001>

<llo_original>
// kernel: two_head_dcnn_forward.3
$region0: #{two_head_dcnn_forward.3}
  #allocation0 [shape = 'u32[]', space=smem, size = 0x4, offset = 0x4, fixed_abs, tag = 'smem constant byte address 0x4 - core index']
  #allocation1 [shape = 'u32[144,128]{1,0:T(1,128)}', space=vmem, size = 0x12000, scoped, tag = 'internal scratch']
  %s0 = inlined_call_operand.hbm [shape: f32[2,16], index: 0, kind: input, shape index: {}]
  %s1 = inlined_call_operand.hbm [shape: f32[16,32], index: 1, kind: input, shape index: {}]
  %s2 = inlined_call_operand.hbm [shape: f32[1,32], index: 2, kind: input, shape index: {}]
  %s3 = inlined_call_operand.hbm [shape: f32[32,32], index: 3, kind: input, shape index: {}]
  %s4 = inlined_call_operand.hbm [shape: f32[1,32], index: 4, kind: input, shape index: {}]
  %s5 = inlined_call_operand.hbm [shape: f32[32,36], index: 5, kind: input, shape index: {}]
  %s6 = inlined_call_operand.hbm [shape: f32[1,36], index: 6, kind: input, shape index: {}]
  %s7 = inlined_call_operand.vmem [shape: f32[2,36], index: 7, kind: output, shape index: {}]
  %s8 = sld [smem:[#allocation0]]
  $region66: #{two_head_dcnn_forward.3} parent=0
    _
  %s10 = ssub.s32 1, %s8
  %s11 = scalar_select 0, %s10, %s8
  $region1: #{two_head_dcnn_forward.3} parent=0
    #allocation2 [shape = 'u8[1024]{0}', space=vmem, size = 0x400, scoped, tag = 'input window, operand 0, single buffered']
    #allocation3 [shape = 's32[1]{0}', space=sflag, size = 0x4, scoped, tag = 'scoped memory for two_head_dcnn_forward.3']
    #allocation4 [shape = 'u8[8192]{0}', space=vmem, size = 0x2000, scoped, tag = 'input window, operand 1, single buffered']
    #allocation5 [shape = 's32[1]{0}', space=sflag, size = 0x4, scoped, tag = 'scoped memory for two_head_dcnn_forward.3']
    #allocation6 [shape = 'u8[512]{0}', space=vmem, size = 0x400, scoped, tag = 'input window, operand 2, single buffered']
    #allocation7 [shape = 'u8[16384]{0}', space=vmem, size = 0x4000, scoped, tag = 'input window, operand 3, single buffered']
    #allocation8 [shape = 's32[1]{0}', space=sflag, size = 0x4, scoped, tag = 'scoped memory for two_head_dcnn_forward.3']
    #allocation9 [shape = 'u8[512]{0}', space=vmem, size = 0x400, scoped, tag = 'input window, operand 4, single buffered']
    #allocation10 [shape = 'u8[16384]{0}', space=vmem, size = 0x4000, scoped, tag = 'input window, operand 5, single buffered']
    #allocation11 [shape = 's32[1]{0}', space=sflag, size = 0x4, scoped, tag = 'scoped memory for two_head_dcnn_forward.3']
    #allocation12 [shape = 'u8[512]{0}', space=vmem, size = 0x400, scoped, tag = 'input window, operand 6, single buffered']
    %12 = vsyncpa [#allocation3], 0
    %13 = vsyncpa [#allocation5], 0
    %14 = vsyncpa [#allocation8], 0
    %15 = vsyncpa [#allocation11], 0
    // Predicated region
    $region2: #{two_head_dcnn_forward.3} parent=1 // pred_check
      _
    $region3: #{two_head_dcnn_forward.3} parent=1 // pred_check_branch
      %17 = sbr.rel (0) target = $region5
    $region4: #{two_head_dcnn_forward.3} parent=1 // pred_region
      %s19 = ssub.s32 32, 32
      %20 = vsyncadd [#allocation3], %s19
      %s22 = sshll.u32 [#allocation2], 4
      %s23 = int_to_ptr.vmem [resolvable:$true] %s22
      %25 = dma.hbm_to_vmem [thread:$0]  %s0, 32, %s23, [#allocation3]
    $region5: #{two_head_dcnn_forward.3} parent=1 // pred_fallthru
      _
    // Predicated region
    $region6: #{two_head_dcnn_forward.3} parent=1 // pred_check
      _
    $region7: #{two_head_dcnn_forward.3} parent=1 // pred_check_branch
      %27 = sbr.rel (0) target = $region9
    $region8: #{two_head_dcnn_forward.3} parent=1 // pred_region
      %s29 = ssub.s32 256, 256
      %30 = vsyncadd [#allocation5], %s29
      %s31 = sshll.u32 [#allocation4], 4
      %s32 = int_to_ptr.vmem [resolvable:$true] %s31
      %37 = dma.hbm_to_vmem [thread:$0]  %s1, 256, %s32, [#allocation5], 128, 128, 8
    $region9: #{two_head_dcnn_forward.3} parent=1 // pred_fallthru
      _
    // Predicated region
    $region10: #{two_head_dcnn_forward.3} parent=1 // pred_check
      _
    $region11: #{two_head_dcnn_forward.3} parent=1 // pred_check_branch
      %39 = sbr.rel (0) target = $region13
    $region12: #{two_head_dcnn_forward.3} parent=1 // pred_region
      %s41 = ssub.s32 16, 16
      %42 = vsyncadd [#allocation5], %s41
      %s44 = sshll.u32 [#allocation6], 4
      %s45 = int_to_ptr.vmem [resolvable:$true] %s44
      %47 = dma.hbm_to_vmem [thread:$0]  %s2, 16, %s45, [#allocation5]
    $region13: #{two_head_dcnn_forward.3} parent=1 // pred_fallthru
      _
    // Predicated region
    $region14: #{two_head_dcnn_forward.3} parent=1 // pred_check
      _
    $region15: #{two_head_dcnn_forward.3} parent=1 // pred_check_branch
      %49 = sbr.rel (0) target = $region17
    $region16: #{two_head_dcnn_forward.3} parent=1 // pred_region
      %s51 = ssub.s32 512, 512
      %52 = vsyncadd [#allocation8], %s51
      %s53 = sshll.u32 [#allocation7], 4
      %s54 = int_to_ptr.vmem [resolvable:$true] %s53
      %59 = dma.hbm_to_vmem [thread:$0]  %s3, 512, %s54, [#allocation8], 128, 128, 8
    $region17: #{two_head_dcnn_forward.3} parent=1 // pred_fallthru
      _
    // Predicated region
    $region18: #{two_head_dcnn_forward.3} parent=1 // pred_check
      _
    $region19: #{two_head_dcnn_forward.3} parent=1 // pred_check_branch
      %61 = sbr.rel (0) target = $region21
    $region20: #{two_head_dcnn_forward.3} parent=1 // pred_region
      %s63 = ssub.s32 16, 16
      %64 = vsyncadd [#allocation8], %s63
      %s66 = sshll.u32 [#allocation9], 4
      %s67 = int_to_ptr.vmem [resolvable:$true] %s66
      %69 = dma.hbm_to_vmem [thread:$0]  %s4, 16, %s67, [#allocation8]
    $region21: #{two_head_dcnn_forward.3} parent=1 // pred_fallthru
      _
    // Predicated region
    $region22: #{two_head_dcnn_forward.3} parent=1 // pred_check
      _
    $region23: #{two_head_dcnn_forward.3} parent=1 // pred_check_branch
      %71 = sbr.rel (0) target = $region25
    $region24: #{two_head_dcnn_forward.3} parent=1 // pred_region
      %s73 = ssub.s32 512, 512
      %74 = vsyncadd [#allocation11], %s73
      %s75 = sshll.u32 [#allocation10], 4
      %s76 = int_to_ptr.vmem [resolvable:$true] %s75
      %81 = dma.hbm_to_vmem [thread:$0]  %s5, 512, %s76, [#allocation11], 128, 128, 8
    $region25: #{two_head_dcnn_forward.3} parent=1 // pred_fallthru
      _
    // Predicated region
    $region26: #{two_head_dcnn_forward.3} parent=1 // pred_check
      _
    $region27: #{two_head_dcnn_forward.3} parent=1 // pred_check_branch
      %83 = sbr.rel (0) target = $region29
    $region28: #{two_head_dcnn_forward.3} parent=1 // pred_region
      %s85 = ssub.s32 16, 16
      %86 = vsyncadd [#allocation11], %s85
      %s88 = sshll.u32 [#allocation12], 4
      %s89 = int_to_ptr.vmem [resolvable:$true] %s88
      %91 = dma.hbm_to_vmem [thread:$0]  %s6, 16, %s89, [#allocation11]
    $region29: #{two_head_dcnn_forward.3} parent=1 // pred_fallthru
      _
    // Predicated region
    $region30: #{two_head_dcnn_forward.3} parent=1 // pred_check
      _
    $region31: #{two_head_dcnn_forward.3} parent=1 // pred_check_branch
      %93 = sbr.rel (0) target = $region33
    $region32: #{two_head_dcnn_forward.3} parent=1 // pred_region
      %94 = dma.done [#allocation3], 32
    $region33: #{two_head_dcnn_forward.3} parent=1 // pred_fallthru
      _
    // Predicated region
    $region34: #{two_head_dcnn_forward.3} parent=1 // pred_check
      _
    $region35: #{two_head_dcnn_forward.3} parent=1 // pred_check_branch
      %96 = sbr.rel (0) target = $region37
    $region36: #{two_head_dcnn_forward.3} parent=1 // pred_region
      %97 = dma.done [#allocation5], 256
    $region37: #{two_head_dcnn_forward.3} parent=1 // pred_fallthru
      _
    // Predicated region
    $region38: #{two_head_dcnn_forward.3} parent=1 // pred_check
      _
    $region39: #{two_head_dcnn_forward.3} parent=1 // pred_check_branch
      %99 = sbr.rel (0) target = $region41
    $region40: #{two_head_dcnn_forward.3} parent=1 // pred_region
      %100 = dma.done [#allocation5], 16
    $region41: #{two_head_dcnn_forward.3} parent=1 // pred_fallthru
      _
    // Predicated region
    $region42: #{two_head_dcnn_forward.3} parent=1 // pred_check
      _
    $region43: #{two_head_dcnn_forward.3} parent=1 // pred_check_branch
      %102 = sbr.rel (0) target = $region45
    $region44: #{two_head_dcnn_forward.3} parent=1 // pred_region
      %103 = dma.done [#allocation8], 512
    $region45: #{two_head_dcnn_forward.3} parent=1 // pred_fallthru
      _
    // Predicated region
    $region46: #{two_head_dcnn_forward.3} parent=1 // pred_check
      _
    $region47: #{two_head_dcnn_forward.3} parent=1 // pred_check_branch
      %105 = sbr.rel (0) target = $region49
    $region48: #{two_head_dcnn_forward.3} parent=1 // pred_region
      %106 = dma.done [#allocation8], 16
    $region49: #{two_head_dcnn_forward.3} parent=1 // pred_fallthru
      _
    // Predicated region
    $region50: #{two_head_dcnn_forward.3} parent=1 // pred_check
      _
    $region51: #{two_head_dcnn_forward.3} parent=1 // pred_check_branch
      %108 = sbr.rel (0) target = $region53
    $region52: #{two_head_dcnn_forward.3} parent=1 // pred_region
      %109 = dma.done [#allocation11], 512
    $region53: #{two_head_dcnn_forward.3} parent=1 // pred_fallthru
      _
    // Predicated region
    $region54: #{two_head_dcnn_forward.3} parent=1 // pred_check
      _
    $region55: #{two_head_dcnn_forward.3} parent=1 // pred_check_branch
      %111 = sbr.rel (0) target = $region57
    $region56: #{two_head_dcnn_forward.3} parent=1 // pred_region
      %112 = dma.done [#allocation11], 16
    $region57: #{two_head_dcnn_forward.3} parent=1 // pred_fallthru
      _
    %v113 = vld [vmem:[#allocation2] sm:$0x3]
    %v114 = vld [vmem:[#allocation4] sm:$0xff]
    %v115 = vld [vmem:[#allocation4 + $0x8] sm:$0xff]
    %v116 = vld [vmem:[#allocation6] sm:$0x1]
    %v118 = vlaneseq
    %v119 = vshrl.u32 %v118, 7
    %v120 = vsub.s32 0, %v119
    %v121 = vrot.slane %v116, %v120
    %vm123 = vcmask 130048
    %v125 = vsel %vm123, %v113, 0
    %127 = vmatprep.subr.mxu0 0.0
    %128 = vmatpush1.msra.mxu0 %v114
    %129 = vmatprep.subr.mxu0 0.0
    %130 = vmatpush1.msra.mxu0 %v115
    %131 = vmatprep.subr.mxu0 0.0
    %132 = vmatpush1.msra.mxu0 0.0
    %133 = vmatprep.subr.mxu0 0.0
    %134 = vmatpush1.msra.mxu0 0.0
    %135 = vmatprep.subr.mxu0 0.0
    %136 = vmatpush1.msra.mxu0 0.0
    %137 = vmatprep.subr.mxu0 0.0
    %138 = vmatpush1.msra.mxu0 0.0
    %139 = vmatprep.subr.mxu0 0.0
    %140 = vmatpush1.msra.mxu0 0.0
    %141 = vmatprep.subr.mxu0 0.0
    %142 = vmatpush1.msra.mxu0 0.0
    %143 = vmatprep.subr.mxu0 0.0
    %144 = vmatpush1.msra.mxu0 0.0
    %145 = vmatprep.subr.mxu0 0.0
    %146 = vmatpush1.msra.mxu0 0.0
    %147 = vmatprep.subr.mxu0 0.0
    %148 = vmatpush1.msra.mxu0 0.0
    %149 = vmatprep.subr.mxu0 0.0
    %150 = vmatpush1.msra.mxu0 0.0
    %151 = vmatprep.subr.mxu0 0.0
    %152 = vmatpush1.msra.mxu0 0.0
    %153 = vmatprep.subr.mxu0 0.0
    %154 = vmatpush1.msra.mxu0 0.0
    %155 = vmatprep.subr.mxu0 0.0
    %156 = vmatpush1.msra.mxu0 0.0
    %157 = vmatprep.subr.mxu0 0.0
    %158 = vmatpush1.msra.mxu0 0.0
    %159 = vmatprep.subr.mxu0 0.0
    %160 = vmatpush1.msra.mxu0 0.0
    %161 = vmatprep.subr.mxu0 0.0
    %162 = vmatpush1.msra.mxu0 0.0
    %163 = vmatprep.subr.mxu0 0.0
    %164 = vmatpush1.msra.mxu0 0.0
    %165 = vmatprep.subr.mxu0 0.0
    %166 = vmatpush1.msra.mxu0 0.0
    %167 = vmatprep.subr.mxu0 0.0
    %168 = vmatpush1.msra.mxu0 0.0
    %169 = vmatprep.subr.mxu0 0.0
    %170 = vmatpush1.msra.mxu0 0.0
    %171 = vmatprep.subr.mxu0 0.0
    %172 = vmatpush1.msra.mxu0 0.0
    %173 = vmatprep.subr.mxu0 0.0
    %174 = vmatpush1.msra.mxu0 0.0
    %175 = vmatprep.subr.mxu0 0.0
    %176 = vmatpush1.msra.mxu0 0.0
    %177 = vmatprep.subr.mxu0 0.0
    %178 = vmatpush1.msra.mxu0 0.0
    %179 = vmatprep.subr.mxu0 0.0
    %180 = vmatpush1.msra.mxu0 0.0
    %181 = vmatprep.subr.mxu0 0.0
    %182 = vmatpush1.msra.mxu0 0.0
    %183 = vmatprep.subr.mxu0 0.0
    %184 = vmatpush1.msra.mxu0 0.0
    %185 = vmatprep.subr.mxu0 0.0
    %186 = vmatpush1.msra.mxu0 0.0
    %187 = vmatprep.subr.mxu0 0.0
    %188 = vmatpush1.msra.mxu0 0.0
    %189 = vmatprep.subr.mxu0 0.0
    %190 = vmatpush1.msra.mxu0 0.0
    %191 = vmatprep.mubr.f32.mxu0 0.0
    %192 = vmatmul.mubr.f32.gmra.mrb[0].mxu0 %v125
    %v193 = vpop.f32.mrb[0].mxu0
    %v194 = vadd.f32 %v121, %v193
    %v195 = vpop.f32.mrb[0].mxu0
    %196 = vdwg.mxu0
    %v197 = vmax.f32 %v194, 0.0
    %v198 = vld [vmem:[#allocation7] sm:$0xff]
    %v199 = vld [vmem:[#allocation7 + $0x8] sm:$0xff]
    %v200 = vld [vmem:[#allocation7 + $0x10] sm:$0xff]
    %v201 = vld [vmem:[#allocation7 + $0x18] sm:$0xff]
    %v202 = vld [vmem:[#allocation9] sm:$0x1]
    %v204 = vlaneseq
    %v205 = vshrl.u32 %v204, 7
    %v206 = vsub.s32 0, %v205
    %v207 = vrot.slane %v202, %v206
    %vm209 = vcmask 261120
    %v211 = vsel %vm209, %v197, 0
    %213 = vmatprep.subr.mxu0 0.0
    %214 = vmatpush1.msra.mxu0 %v198
    %215 = vmatprep.subr.mxu0 0.0
    %216 = vmatpush1.msra.mxu0 %v199
    %217 = vmatprep.subr.mxu0 0.0
    %218 = vmatpush1.msra.mxu0 %v200
    %219 = vmatprep.subr.mxu0 0.0
    %220 = vmatpush1.msra.mxu0 %v201
    %221 = vmatprep.subr.mxu0 0.0
    %222 = vmatpush1.msra.mxu0 0.0
    %223 = vmatprep.subr.mxu0 0.0
    %224 = vmatpush1.msra.mxu0 0.0
    %225 = vmatprep.subr.mxu0 0.0
    %226 = vmatpush1.msra.mxu0 0.0
    %227 = vmatprep.subr.mxu0 0.0
    %228 = vmatpush1.msra.mxu0 0.0
    %229 = vmatprep.subr.mxu0 0.0
    %230 = vmatpush1.msra.mxu0 0.0
    %231 = vmatprep.subr.mxu0 0.0
    %232 = vmatpush1.msra.mxu0 0.0
    %233 = vmatprep.subr.mxu0 0.0
    %234 = vmatpush1.msra.mxu0 0.0
    %235 = vmatprep.subr.mxu0 0.0
    %236 = vmatpush1.msra.mxu0 0.0
    %237 = vmatprep.subr.mxu0 0.0
    %238 = vmatpush1.msra.mxu0 0.0
    %239 = vmatprep.subr.mxu0 0.0
    %240 = vmatpush1.msra.mxu0 0.0
    %241 = vmatprep.subr.mxu0 0.0
    %242 = vmatpush1.msra.mxu0 0.0
    %243 = vmatprep.subr.mxu0 0.0
    %244 = vmatpush1.msra.mxu0 0.0
    %245 = vmatprep.subr.mxu0 0.0
    %246 = vmatpush1.msra.mxu0 0.0
    %247 = vmatprep.subr.mxu0 0.0
    %248 = vmatpush1.msra.mxu0 0.0
    %249 = vmatprep.subr.mxu0 0.0
    %250 = vmatpush1.msra.mxu0 0.0
    %251 = vmatprep.subr.mxu0 0.0
    %252 = vmatpush1.msra.mxu0 0.0
    %253 = vmatprep.subr.mxu0 0.0
    %254 = vmatpush1.msra.mxu0 0.0
    %255 = vmatprep.subr.mxu0 0.0
    %256 = vmatpush1.msra.mxu0 0.0
    %257 = vmatprep.subr.mxu0 0.0
    %258 = vmatpush1.msra.mxu0 0.0
    %259 = vmatprep.subr.mxu0 0.0
    %260 = vmatpush1.msra.mxu0 0.0
    %261 = vmatprep.subr.mxu0 0.0
    %262 = vmatpush1.msra.mxu0 0.0
    %263 = vmatprep.subr.mxu0 0.0
    %264 = vmatpush1.msra.mxu0 0.0
    %265 = vmatprep.subr.mxu0 0.0
    %266 = vmatpush1.msra.mxu0 0.0
    %267 = vmatprep.subr.mxu0 0.0
    %268 = vmatpush1.msra.mxu0 0.0
    %269 = vmatprep.subr.mxu0 0.0
    %270 = vmatpush1.msra.mxu0 0.0
    %271 = vmatprep.subr.mxu0 0.0
    %272 = vmatpush1.msra.mxu0 0.0
    %273 = vmatprep.subr.mxu0 0.0
    %274 = vmatpush1.msra.mxu0 0.0
    %275 = vmatprep.subr.mxu0 0.0
    %276 = vmatpush1.msra.mxu0 0.0
    %277 = vmatprep.mubr.f32.mxu0 0.0
    %278 = vmatmul.mubr.f32.gmra.mrb[0].mxu0 %v211
    %v279 = vpop.f32.mrb[0].mxu0
    %v280 = vadd.f32 %v207, %v279
    %v281 = vpop.f32.mrb[0].mxu0
    %282 = vdwg.mxu0
    %v283 = vmax.f32 %v280, 0.0
    %v284 = vld [vmem:[#allocation10] sm:$0xff]
    %v285 = vld [vmem:[#allocation10 + $0x8] sm:$0xff]
    %v286 = vld [vmem:[#allocation10 + $0x10] sm:$0xff]
    %v287 = vld [vmem:[#allocation10 + $0x18] sm:$0xff]
    %v288 = vld [vmem:[#allocation12] sm:$0x1]
    %v290 = vlaneseq
    %v291 = vshrl.u32 %v290, 7
    %v292 = vsub.s32 0, %v291
    %v293 = vrot.slane %v288, %v292
    %v296 = vsel %vm209, %v283, 0
    %298 = vmatprep.subr.mxu0 0.0
    %299 = vmatpush1.msra.mxu0 %v284
    %300 = vmatprep.subr.mxu0 0.0
    %301 = vmatpush1.msra.mxu0 %v285
    %302 = vmatprep.subr.mxu0 0.0
    %303 = vmatpush1.msra.mxu0 %v286
    %304 = vmatprep.subr.mxu0 0.0
    %305 = vmatpush1.msra.mxu0 %v287
    %306 = vmatprep.subr.mxu0 0.0
    %307 = vmatpush1.msra.mxu0 0.0
    %308 = vmatprep.subr.mxu0 0.0
    %309 = vmatpush1.msra.mxu0 0.0
    %310 = vmatprep.subr.mxu0 0.0
    %311 = vmatpush1.msra.mxu0 0.0
    %312 = vmatprep.subr.mxu0 0.0
    %313 = vmatpush1.msra.mxu0 0.0
    %314 = vmatprep.subr.mxu0 0.0
    %315 = vmatpush1.msra.mxu0 0.0
    %316 = vmatprep.subr.mxu0 0.0
    %317 = vmatpush1.msra.mxu0 0.0
    %318 = vmatprep.subr.mxu0 0.0
    %319 = vmatpush1.msra.mxu0 0.0
    %320 = vmatprep.subr.mxu0 0.0
    %321 = vmatpush1.msra.mxu0 0.0
    %322 = vmatprep.subr.mxu0 0.0
    %323 = vmatpush1.msra.mxu0 0.0
    %324 = vmatprep.subr.mxu0 0.0
    %325 = vmatpush1.msra.mxu0 0.0
    %326 = vmatprep.subr.mxu0 0.0
    %327 = vmatpush1.msra.mxu0 0.0
    %328 = vmatprep.subr.mxu0 0.0
    %329 = vmatpush1.msra.mxu0 0.0
    %330 = vmatprep.subr.mxu0 0.0
    %331 = vmatpush1.msra.mxu0 0.0
    %332 = vmatprep.subr.mxu0 0.0
    %333 = vmatpush1.msra.mxu0 0.0
    %334 = vmatprep.subr.mxu0 0.0
    %335 = vmatpush1.msra.mxu0 0.0
    %336 = vmatprep.subr.mxu0 0.0
    %337 = vmatpush1.msra.mxu0 0.0
    %338 = vmatprep.subr.mxu0 0.0
    %339 = vmatpush1.msra.mxu0 0.0
    %340 = vmatprep.subr.mxu0 0.0
    %341 = vmatpush1.msra.mxu0 0.0
    %342 = vmatprep.subr.mxu0 0.0
    %343 = vmatpush1.msra.mxu0 0.0
    %344 = vmatprep.subr.mxu0 0.0
    %345 = vmatpush1.msra.mxu0 0.0
    %346 = vmatprep.subr.mxu0 0.0
    %347 = vmatpush1.msra.mxu0 0.0
    %348 = vmatprep.subr.mxu0 0.0
    %349 = vmatpush1.msra.mxu0 0.0
    %350 = vmatprep.subr.mxu0 0.0
    %351 = vmatpush1.msra.mxu0 0.0
    %352 = vmatprep.subr.mxu0 0.0
    %353 = vmatpush1.msra.mxu0 0.0
    %354 = vmatprep.subr.mxu0 0.0
    %355 = vmatpush1.msra.mxu0 0.0
    %356 = vmatprep.subr.mxu0 0.0
    %357 = vmatpush1.msra.mxu0 0.0
    %358 = vmatprep.subr.mxu0 0.0
    %359 = vmatpush1.msra.mxu0 0.0
    %360 = vmatprep.subr.mxu0 0.0
    %361 = vmatpush1.msra.mxu0 0.0
    %362 = vmatprep.mubr.f32.mxu0 0.0
    %363 = vmatmul.mubr.f32.gmra.mrb[0].mxu0 %v296
    %v364 = vpop.f32.mrb[0].mxu0
    %v365 = vadd.f32 %v293, %v364
    %v366 = vpop.f32.mrb[0].mxu0
    %367 = vdwg.mxu0
    %v368 = vmax.f32 %v365, 0.0
    %vm369 = vcmask 287744
    %370 = vst.msk [vmem:[%s7] sm:$0x3] %vm369, %v368
    // Predicated region
    $region58: #{two_head_dcnn_forward.3} parent=1 // pred_check
      _
    $region59: #{two_head_dcnn_forward.3} parent=1 // pred_check_branch
      %372 = sbr.rel (0) target = $region61
    $region60: #{two_head_dcnn_forward.3} parent=1 // pred_region
      _
    $region61: #{two_head_dcnn_forward.3} parent=1 // pred_fallthru
      _
    // Predicated region
    $region62: #{two_head_dcnn_forward.3} parent=1 // pred_check
      _
    $region63: #{two_head_dcnn_forward.3} parent=1 // pred_check_branch
      %374 = sbr.rel (0) target = $region65
    $region64: #{two_head_dcnn_forward.3} parent=1 // pred_region
      _
    $region65: #{two_head_dcnn_forward.3} parent=1 // pred_fallthru
      _
    %375 = vsyncpa [#allocation3], 1
    %376 = vsyncpa [#allocation5], 1
    %377 = vsyncpa [#allocation8], 1
    %378 = vsyncpa [#allocation11], 1

// kernel: two_head_dcnn_forward.4
$region0: #{two_head_dcnn_forward.4}
  #allocation0 [shape = 'u32[]', space=smem, size = 0x4, offset = 0x4, fixed_abs, tag = 'smem constant byte address 0x4 - core index']
  #allocation1 [shape = 'u32[144,128]{1,0:T(1,128)}', space=vmem, size = 0x12000, scoped, tag = 'internal scratch']
  %s0 = inlined_call_operand.vmem [shape: f32[8,36], index: 0, kind: input, shape index: {}]
  %s1 = inlined_call_operand.vmem [shape: f32[36,50], index: 1, kind: input, shape index: {}]
  %s2 = inlined_call_operand.vmem [shape: f32[8,1], index: 2, kind: input, shape index: {}]
  %s3 = inlined_call_operand.vmem [shape: f32[8,50], index: 3, kind: output, shape index: {}]
  %s4 = sld [smem:[#allocation0]]
  $region22: #{two_head_dcnn_forward.4} parent=0
    _
  %s6 = ssub.s32 1, %s4
  %s7 = scalar_select 0, %s6, %s4
  // Predicated region
  $region2: #{two_head_dcnn_forward.4} parent=0 // pred_check
    _
  $region3: #{two_head_dcnn_forward.4} parent=0 // pred_check_branch
    %9 = sbr.rel (0) target = $region5
  $region4: #{two_head_dcnn_forward.4} parent=0 // pred_region
    _
  $region5: #{two_head_dcnn_forward.4} parent=0 // pred_fallthru
    _
  // Predicated region
  $region6: #{two_head_dcnn_forward.4} parent=0 // pred_check
    _
  $region7: #{two_head_dcnn_forward.4} parent=0 // pred_check_branch
    %11 = sbr.rel (0) target = $region9
  $region8: #{two_head_dcnn_forward.4} parent=0 // pred_region
    _
  $region9: #{two_head_dcnn_forward.4} parent=0 // pred_fallthru
    _
  // Predicated region
  $region10: #{two_head_dcnn_forward.4} parent=0 // pred_check
    _
  $region11: #{two_head_dcnn_forward.4} parent=0 // pred_check_branch
    %13 = sbr.rel (0) target = $region13
  $region12: #{two_head_dcnn_forward.4} parent=0 // pred_region
    _
  $region13: #{two_head_dcnn_forward.4} parent=0 // pred_fallthru
    _
  %v14 = vld [vmem:[%s0] sm:$0xff]
  %v15 = vld [vmem:[%s1] sm:$0xff]
  %v16 = vld [vmem:[%s1 + $0x8] sm:$0xff]
  %v17 = vld [vmem:[%s1 + $0x10] sm:$0xff]
  %v18 = vld [vmem:[%s1 + $0x18] sm:$0xff]
  %v19 = vld [vmem:[%s1 + $0x20] sm:$0xf]
  %v20 = vld [vmem:[%s2] sm:$0xff]
  %22 = vset.pattern.permute.xlu0 0
  %23 = vperm.xlu0 %22, %v20
  %v24 = vpop.permute.xlu0 %23
  %vm26 = vcmask 293888
  %v28 = vsel %vm26, %v14, 0
  %vm30 = vcmask 1043456
  %v32 = vsel %vm30, %v19, 0
  %34 = vmatprep.subr.mxu0 0.0
  %35 = vmatpush1.msra.mxu0 %v15
  %36 = vmatprep.subr.mxu0 0.0
  %37 = vmatpush1.msra.mxu0 %v16
  %38 = vmatprep.subr.mxu0 0.0
  %39 = vmatpush1.msra.mxu0 %v17
  %40 = vmatprep.subr.mxu0 0.0
  %41 = vmatpush1.msra.mxu0 %v18
  %42 = vmatprep.subr.mxu0 0.0
  %43 = vmatpush1.msra.mxu0 %v32
  %44 = vmatprep.subr.mxu0 0.0
  %45 = vmatpush1.msra.mxu0 0.0
  %46 = vmatprep.subr.mxu0 0.0
  %47 = vmatpush1.msra.mxu0 0.0
  %48 = vmatprep.subr.mxu0 0.0
  %49 = vmatpush1.msra.mxu0 0.0
  %50 = vmatprep.subr.mxu0 0.0
  %51 = vmatpush1.msra.mxu0 0.0
  %52 = vmatprep.subr.mxu0 0.0
  %53 = vmatpush1.msra.mxu0 0.0
  %54 = vmatprep.subr.mxu0 0.0
  %55 = vmatpush1.msra.mxu0 0.0
  %56 = vmatprep.subr.mxu0 0.0
  %57 = vmatpush1.msra.mxu0 0.0
  %58 = vmatprep.subr.mxu0 0.0
  %59 = vmatpush1.msra.mxu0 0.0
  %60 = vmatprep.subr.mxu0 0.0
  %61 = vmatpush1.msra.mxu0 0.0
  %62 = vmatprep.subr.mxu0 0.0
  %63 = vmatpush1.msra.mxu0 0.0
  %64 = vmatprep.subr.mxu0 0.0
  %65 = vmatpush1.msra.mxu0 0.0
  %66 = vmatprep.subr.mxu0 0.0
  %67 = vmatpush1.msra.mxu0 0.0
  %68 = vmatprep.subr.mxu0 0.0
  %69 = vmatpush1.msra.mxu0 0.0
  %70 = vmatprep.subr.mxu0 0.0
  %71 = vmatpush1.msra.mxu0 0.0
  %72 = vmatprep.subr.mxu0 0.0
  %73 = vmatpush1.msra.mxu0 0.0
  %74 = vmatprep.subr.mxu0 0.0
  %75 = vmatpush1.msra.mxu0 0.0
  %76 = vmatprep.subr.mxu0 0.0
  %77 = vmatpush1.msra.mxu0 0.0
  %78 = vmatprep.subr.mxu0 0.0
  %79 = vmatpush1.msra.mxu0 0.0
  %80 = vmatprep.subr.mxu0 0.0
  %81 = vmatpush1.msra.mxu0 0.0
  %82 = vmatprep.subr.mxu0 0.0
  %83 = vmatpush1.msra.mxu0 0.0
  %84 = vmatprep.subr.mxu0 0.0
  %85 = vmatpush1.msra.mxu0 0.0
  %86 = vmatprep.subr.mxu0 0.0
  %87 = vmatpush1.msra.mxu0 0.0
  %88 = vmatprep.subr.mxu0 0.0
  %89 = vmatpush1.msra.mxu0 0.0
  %90 = vmatprep.subr.mxu0 0.0
  %91 = vmatpush1.msra.mxu0 0.0
  %92 = vmatprep.subr.mxu0 0.0
  %93 = vmatpush1.msra.mxu0 0.0
  %94 = vmatprep.subr.mxu0 0.0
  %95 = vmatpush1.msra.mxu0 0.0
  %96 = vmatprep.subr.mxu0 0.0
  %97 = vmatpush1.msra.mxu0 0.0
  %98 = vmatprep.mubr.f32.mxu0 0.0
  %99 = vmatmul.mubr.f32.gmra.mrb[0].mxu0 %v28
  %v100 = vpop.f32.mrb[0].mxu0
  %v101 = vadd.f32 %v24, %v100
  %v102 = vpop.f32.mrb[0].mxu0
  %103 = vdwg.mxu0
  %v104 = vmax.f32 %v101, 0.0
  %vm105 = vcmask 408576
  %106 = vst.msk [vmem:[%s3] sm:$0xff] %vm105, %v104
  // Predicated region
  $region14: #{two_head_dcnn_forward.4} parent=0 // pred_check
    _
  $region15: #{two_head_dcnn_forward.4} parent=0 // pred_check_branch
    %108 = sbr.rel (0) target = $region17
  $region16: #{two_head_dcnn_forward.4} parent=0 // pred_region
    _
  $region17: #{two_head_dcnn_forward.4} parent=0 // pred_fallthru
    _
  // Predicated region
  $region18: #{two_head_dcnn_forward.4} parent=0 // pred_check
    _
  $region19: #{two_head_dcnn_forward.4} parent=0 // pred_check_branch
    %110 = sbr.rel (0) target = $region21
  $region20: #{two_head_dcnn_forward.4} parent=0 // pred_region
    _
  $region21: #{two_head_dcnn_forward.4} parent=0 // pred_fallthru
    _

// kernel: two_head_dcnn_forward.5
$region0: #{two_head_dcnn_forward.5}
  #allocation0 [shape = 'u32[]', space=smem, size = 0x4, offset = 0x4, fixed_abs, tag = 'smem constant byte address 0x4 - core index']
  #allocation1 [shape = 'u32[144,128]{1,0:T(1,128)}', space=vmem, size = 0x12000, scoped, tag = 'internal scratch']
  %s0 = inlined_call_operand.vmem [shape: f32[6,72], index: 0, kind: input, shape index: {}]
  %s1 = inlined_call_operand.vmem [shape: f32[72,242], index: 1, kind: input, shape index: {}]
  %s2 = inlined_call_operand.vmem [shape: f32[6,1], index: 2, kind: input, shape index: {}]
  %s3 = inlined_call_operand.vmem [shape: f32[6,242], index: 3, kind: output, shape index: {}]
  %s4 = sld [smem:[#allocation0]]
  $region22: #{two_head_dcnn_forward.5} parent=0
    _
  %s6 = ssub.s32 1, %s4
  %s7 = scalar_select 0, %s6, %s4
  // Predicated region
  $region2: #{two_head_dcnn_forward.5} parent=0 // pred_check
    _
  $region3: #{two_head_dcnn_forward.5} parent=0 // pred_check_branch
    %9 = sbr.rel (0) target = $region5
  $region4: #{two_head_dcnn_forward.5} parent=0 // pred_region
    _
  $region5: #{two_head_dcnn_forward.5} parent=0 // pred_fallthru
    _
  // Predicated region
  $region6: #{two_head_dcnn_forward.5} parent=0 // pred_check
    _
  $region7: #{two_head_dcnn_forward.5} parent=0 // pred_check_branch
    %11 = sbr.rel (0) target = $region9
  $region8: #{two_head_dcnn_forward.5} parent=0 // pred_region
    _
  $region9: #{two_head_dcnn_forward.5} parent=0 // pred_fallthru
    _
  // Predicated region
  $region10: #{two_head_dcnn_forward.5} parent=0 // pred_check
    _
  $region11: #{two_head_dcnn_forward.5} parent=0 // pred_check_branch
    %13 = sbr.rel (0) target = $region13
  $region12: #{two_head_dcnn_forward.5} parent=0 // pred_region
    _
  $region13: #{two_head_dcnn_forward.5} parent=0 // pred_fallthru
    _
  %v14 = vld [vmem:[%s0] sm:$0x3f]
  %v15 = vld [vmem:[%s1] sm:$0xff]
  %v16 = vld [vmem:[%s1 + $0x8] sm:$0xff]
  %v17 = vld [vmem:[%s1 + $0x10] sm:$0xff]
  %v18 = vld [vmem:[%s1 + $0x18] sm:$0xff]
  %v19 = vld [vmem:[%s1 + $0x20] sm:$0xff]
  %v20 = vld [vmem:[%s1 + $0x28] sm:$0xff]
  %v21 = vld [vmem:[%s1 + $0x30] sm:$0xff]
  %v22 = vld [vmem:[%s1 + $0x38] sm:$0xff]
  %v23 = vld [vmem:[%s1 + $0x40] sm:$0xff]
  %v24 = vld [vmem:[%s1 + $0x48] sm:$0xff]
  %v25 = vld [vmem:[%s1 + $0x50] sm:$0xff]
  %v26 = vld [vmem:[%s1 + $0x58] sm:$0xff]
  %v27 = vld [vmem:[%s1 + $0x60] sm:$0xff]
  %v28 = vld [vmem:[%s1 + $0x68] sm:$0xff]
  %v29 = vld [vmem:[%s1 + $0x70] sm:$0xff]
  %v30 = vld [vmem:[%s1 + $0x78] sm:$0xff]
  %v31 = vld [vmem:[%s1 + $0x80] sm:$0xff]
  %v32 = vld [vmem:[%s1 + $0x88] sm:$0xff]
  %v33 = vld [vmem:[%s2] sm:$0x3f]
  %35 = vset.pattern.permute.xlu0 0
  %36 = vperm.xlu0 %35, %v33
  %v37 = vpop.permute.xlu0 %36
  %vm39 = vcmask 588800
  %v41 = vsel %vm39, %v14, 0
  %43 = vmatprep.subr.mxu0 %v16
  %44 = vmatpush1.msra.mxu0 %v15
  %45 = vmatprep.subr.mxu0 %v18
  %46 = vmatpush1.msra.mxu0 %v17
  %47 = vmatprep.subr.mxu0 %v20
  %48 = vmatpush1.msra.mxu0 %v19
  %49 = vmatprep.subr.mxu0 %v22
  %50 = vmatpush1.msra.mxu0 %v21
  %51 = vmatprep.subr.mxu0 %v24
  %52 = vmatpush1.msra.mxu0 %v23
  %53 = vmatprep.subr.mxu0 %v26
  %54 = vmatpush1.msra.mxu0 %v25
  %55 = vmatprep.subr.mxu0 %v28
  %56 = vmatpush1.msra.mxu0 %v27
  %57 = vmatprep.subr.mxu0 %v30
  %58 = vmatpush1.msra.mxu0 %v29
  %59 = vmatprep.subr.mxu0 %v32
  %60 = vmatpush1.msra.mxu0 %v31
  %61 = vmatprep.subr.mxu0 0.0
  %62 = vmatpush1.msra.mxu0 0.0
  %63 = vmatprep.subr.mxu0 0.0
  %64 = vmatpush1.msra.mxu0 0.0
  %65 = vmatprep.subr.mxu0 0.0
  %66 = vmatpush1.msra.mxu0 0.0
  %67 = vmatprep.subr.mxu0 0.0
  %68 = vmatpush1.msra.mxu0 0.0
  %69 = vmatprep.subr.mxu0 0.0
  %70 = vmatpush1.msra.mxu0 0.0
  %71 = vmatprep.subr.mxu0 0.0
  %72 = vmatpush1.msra.mxu0 0.0
  %73 = vmatprep.subr.mxu0 0.0
  %74 = vmatpush1.msra.mxu0 0.0
  %75 = vmatprep.subr.mxu0 0.0
  %76 = vmatpush1.msra.mxu0 0.0
  %77 = vmatprep.subr.mxu0 0.0
  %78 = vmatpush1.msra.mxu0 0.0
  %79 = vmatprep.subr.mxu0 0.0
  %80 = vmatpush1.msra.mxu0 0.0
  %81 = vmatprep.subr.mxu0 0.0
  %82 = vmatpush1.msra.mxu0 0.0
  %83 = vmatprep.subr.mxu0 0.0
  %84 = vmatpush1.msra.mxu0 0.0
  %85 = vmatprep.subr.mxu0 0.0
  %86 = vmatpush1.msra.mxu0 0.0
  %87 = vmatprep.subr.mxu0 0.0
  %88 = vmatpush1.msra.mxu0 0.0
  %89 = vmatprep.subr.mxu0 0.0
  %90 = vmatpush1.msra.mxu0 0.0
  %91 = vmatprep.subr.mxu0 0.0
  %92 = vmatpush1.msra.mxu0 0.0
  %93 = vmatprep.subr.mxu0 0.0
  %94 = vmatpush1.msra.mxu0 0.0
  %95 = vmatprep.subr.mxu0 0.0
  %96 = vmatpush1.msra.mxu0 0.0
  %97 = vmatprep.subr.mxu0 0.0
  %98 = vmatpush1.msra.mxu0 0.0
  %99 = vmatprep.subr.mxu0 0.0
  %100 = vmatpush1.msra.mxu0 0.0
  %101 = vmatprep.subr.mxu0 0.0
  %102 = vmatpush1.msra.mxu0 0.0
  %103 = vmatprep.subr.mxu0 0.0
  %104 = vmatpush1.msra.mxu0 0.0
  %105 = vmatprep.subr.mxu0 0.0
  %106 = vmatpush1.msra.mxu0 0.0
  %107 = vmatprep.mubr.f32.mxu0 0.0
  %108 = vmatmul.mubr.f32.gmra.mrb[0].mxu0 %v41
  %v109 = vpop.f32.mrb[0].mxu0
  %v110 = vadd.f32 %v37, %v109
  %v111 = vpop.f32.mrb[0].mxu0
  %v112 = vadd.f32 %v37, %v111
  %113 = vdwg.mxu0
  %114 = vst [vmem:[%s3] sm:$0x3f] %v110
  %vm115 = vcmask 930816
  %116 = vst.msk [vmem:[%s3 + $0x8] sm:$0x3f] %vm115, %v112
  // Predicated region
  $region14: #{two_head_dcnn_forward.5} parent=0 // pred_check
    _
  $region15: #{two_head_dcnn_forward.5} parent=0 // pred_check_branch
    %118 = sbr.rel (0) target = $region17
  $region16: #{two_head_dcnn_forward.5} parent=0 // pred_region
    _
  $region17: #{two_head_dcnn_forward.5} parent=0 // pred_fallthru
    _
  // Predicated region
  $region18: #{two_head_dcnn_forward.5} parent=0 // pred_check
    _
  $region19: #{two_head_dcnn_forward.5} parent=0 // pred_check_branch
    %120 = sbr.rel (0) target = $region21
  $region20: #{two_head_dcnn_forward.5} parent=0 // pred_region
    _
  $region21: #{two_head_dcnn_forward.5} parent=0 // pred_fallthru
    _

</llo_original>
